<compile_context>
chip_gen: v5e
topology: v5e:2x2
jax: 0.10.0
libtpu: 0.0.40
codegen_flags: <defaults>
</compile_context>

<pallas_src>
import functools

import jax
import jax.numpy as jnp
from jax.experimental import pallas as pl
from jax.experimental.pallas import tpu as pltpu


# ---------------------------------------------------------------------------
# Tunables
# ---------------------------------------------------------------------------
_BLOCK_CAP_BYTES = 2 << 20    # input bytes per block (1-4 MiB hits HBM roofline)
_TARGET_GRID_STEPS = 8        # >= 2 steps per TensorCore on v7x megacore


def _vmem_limit_bytes():
    """Scoped VMEM limit: half of physical, capped at 64 MiB.

    v5e/v6e (128 MiB/core) -> 64 MiB; v7x (64 MiB/core) -> 32 MiB.  The capped
    block sizes make a larger limit unnecessary; this mainly keeps the compiler
    from allocating oversized scratch.
    """
    try:
        cap = int(pltpu.get_tpu_info().vmem_capacity_bytes)
    except Exception:
        cap = 64 << 20  # conservative (v7x) fallback
    return min(64 << 20, max(32 << 20, cap // 2))


# ---------------------------------------------------------------------------
# Kernels
# ---------------------------------------------------------------------------
def _grn_fused_kernel(x_ref, g_ref, b_ref, o_ref):
    """Fused single-pass GRN.  x_ref/o_ref: (nb, C, HW); g_ref/b_ref: (1, C, 1)."""
    xf = x_ref[...].astype(jnp.float32)
    # Per-(n, c) L2 norm over the spatial (lane) axis, accumulated in f32.
    gx = jnp.sqrt(jnp.sum(xf * xf, axis=-1, keepdims=True))             # (nb, C, 1)
    # Exact reciprocal: approx=True would push ~2^-12 error through the shared
    # per-(n, c) scale and break a 1e-5 tolerance; compute slack makes it free.
    inv = pl.reciprocal(jnp.mean(gx, axis=1, keepdims=True) + 1e-6)     # (nb, 1, 1)
    g = g_ref[...].astype(jnp.float32)                                  # (1, C, 1)
    b = b_ref[...].astype(jnp.float32)                                  # (1, C, 1)
    # gamma*(x*Nx) + beta + x == x*(gamma*Nx + 1) + beta: one mul-add / element.
    s = g * (gx * inv) + 1.0                                            # (nb, C, 1)
    o_ref[...] = (xf * s + b).astype(o_ref.dtype)


def _grn_sumsq_kernel(x_ref, ss_ref, *, hw, thw, mask_tail):
    """Pass 1 of the split path: accumulate per-(n, c) sum of squares over HW tiles.

    x_ref: (1, C, thw); ss_ref: (1, C, 1) f32, resident across the HW grid axis.
    """
    h = pl.program_id(1)
    xf = x_ref[...].astype(jnp.float32)
    if mask_tail:
        # The last HW tile extends past HW; padded lanes hold unspecified data.
        col = h * thw + jax.lax.broadcasted_iota(jnp.int32, xf.shape, 2)
        xf = jnp.where(col < hw, xf, 0.0)
    part = jnp.sum(xf * xf, axis=-1, keepdims=True)                     # (1, C, 1)

    @pl.when(h == 0)
    def _():
        ss_ref[...] = part

    @pl.when(h > 0)
    def _():
        ss_ref[...] += part


def _grn_apply_kernel(x_ref, s_ref, b_ref, o_ref):
    """Pass 2 of the split path: y = x * scale + beta (both f32 per-(n,c))."""
    o_ref[...] = (x_ref[...].astype(jnp.float32) * s_ref[...] + b_ref[...]
                  ).astype(o_ref.dtype)


# ---------------------------------------------------------------------------
# Wrappers
# ---------------------------------------------------------------------------
def _fused_grn(x3, g3, b3, nb, vmem_limit):
    N, C, HW = x3.shape
    itemsize = x3.dtype.itemsize
    cost = pl.CostEstimate(
        flops=6 * N * C * HW,
        transcendentals=2 * N * C,
        bytes_accessed=2 * N * C * HW * itemsize + 2 * C * g3.dtype.itemsize,
    )
    return pl.pallas_call(
        _grn_fused_kernel,
        out_shape=jax.ShapeDtypeStruct((N, C, HW), x3.dtype),
        grid_spec=pltpu.PrefetchScalarGridSpec(
            num_scalar_prefetch=0,
            grid=(pl.cdiv(N, nb),),
            in_specs=[
                pl.BlockSpec((nb, C, HW), lambda n: (n, 0, 0)),
                pl.BlockSpec((1, C, 1), lambda n: (0, 0, 0)),
                pl.BlockSpec((1, C, 1), lambda n: (0, 0, 0)),
            ],
            out_specs=pl.BlockSpec((nb, C, HW), lambda n: (n, 0, 0)),
        ),
        compiler_params=pltpu.CompilerParams(
            dimension_semantics=("parallel",),
            vmem_limit_bytes=vmem_limit,
        ),
        cost_estimate=cost,
    )(x3, g3, b3)


def _split_grn(x3, g3, b3, thw, vmem_limit):
    N, C, HW = x3.shape
    itemsize = x3.dtype.itemsize
    n_hw = pl.cdiv(HW, thw)
    mask_tail = (HW % thw) != 0

    # Pass 1: per-(n, c) sum of squares, accumulated across HW tiles.
    ss = pl.pallas_call(
        functools.partial(_grn_sumsq_kernel, hw=HW, thw=thw, mask_tail=mask_tail),
        out_shape=jax.ShapeDtypeStruct((N, C, 1), jnp.float32),
        grid_spec=pltpu.PrefetchScalarGridSpec(
            num_scalar_prefetch=0,
            grid=(N, n_hw),
            in_specs=[pl.BlockSpec((1, C, thw), lambda n, h: (n, 0, h))],
            out_specs=pl.BlockSpec((1, C, 1), lambda n, h: (n, 0, 0)),
        ),
        compiler_params=pltpu.CompilerParams(
            dimension_semantics=("parallel", "arbitrary"),
            vmem_limit_bytes=vmem_limit,
        ),
        cost_estimate=pl.CostEstimate(
            flops=2 * N * C * HW,
            transcendentals=0,
            bytes_accessed=N * C * HW * itemsize + N * C * 4,
        ),
    )(x3)

    # Tiny per-(n, c) scale math in plain JAX (N*C values).
    gx = jnp.sqrt(ss)                                                   # (N, C, 1)
    nx = gx / (jnp.mean(gx, axis=1, keepdims=True) + 1e-6)
    scale = g3.astype(jnp.float32) * nx + 1.0                           # (N, C, 1)
    beta = b3.astype(jnp.float32)                                       # (1, C, 1)

    # Pass 2: y = x * scale + beta, tile by tile (both axes fully parallel).
    return pl.pallas_call(
        _grn_apply_kernel,
        out_shape=jax.ShapeDtypeStruct((N, C, HW), x3.dtype),
        grid_spec=pltpu.PrefetchScalarGridSpec(
            num_scalar_prefetch=0,
            grid=(N, n_hw),
            in_specs=[
                pl.BlockSpec((1, C, thw), lambda n, h: (n, 0, h)),
                pl.BlockSpec((1, C, 1), lambda n, h: (n, 0, 0)),
                pl.BlockSpec((1, C, 1), lambda n, h: (0, 0, 0)),
            ],
            out_specs=pl.BlockSpec((1, C, thw), lambda n, h: (n, 0, h)),
        ),
        compiler_params=pltpu.CompilerParams(
            dimension_semantics=("parallel", "parallel"),
            vmem_limit_bytes=vmem_limit,
        ),
        cost_estimate=pl.CostEstimate(
            flops=2 * N * C * HW,
            transcendentals=0,
            bytes_accessed=2 * N * C * HW * itemsize + N * C * 4,
        ),
    )(x3, scale, beta)


def grn_pallas(x_nchw, gamma, beta, *, block_cap_bytes=_BLOCK_CAP_BYTES):
    """GRN forward.  x_nchw: (N, C, H, W); gamma, beta: (1, C, 1, 1)."""
    N, C, H, W = x_nchw.shape
    HW = H * W
    x3 = x_nchw.reshape(N, C, HW)
    g3 = gamma.reshape(1, C, 1)
    b3 = beta.reshape(1, C, 1)

    itemsize = x_nchw.dtype.itemsize
    sample_bytes = C * HW * itemsize
    vmem_limit = _vmem_limit_bytes()

    if sample_bytes <= block_cap_bytes:
        # Fused single-pass path (2x HBM traffic).  Cap the input block at
        # block_cap_bytes and target >= _TARGET_GRID_STEPS pipeline steps.
        nb_cap = max(1, block_cap_bytes // sample_bytes)
        nb_steps = max(1, pl.cdiv(N, _TARGET_GRID_STEPS))
        nb = int(max(1, min(nb_cap, nb_steps, N)))
        out3 = _fused_grn(x3, g3, b3, nb, vmem_limit)
    else:
        # Two-pass HW-split path: the only option when one sample's (C, HW)
        # slab exceeds the block budget.
        if HW <= 128:
            # Giant-C corner (C*128*itemsize > cap): keep the full (tiny) HW.
            # TODO(synk): also tile C here if such shapes ever occur.
            thw = HW
        else:
            thw_cap = max(0, (block_cap_bytes // (C * itemsize)) // 128 * 128)
            thw_steps = (pl.cdiv(HW, 4) // 128) * 128   # aim for >= ~4 HW steps
            thw = int(max(128, min(thw_cap, thw_steps)))
        out3 = _split_grn(x3, g3, b3, thw, vmem_limit)

    return out3.reshape(N, C, H, W)


def grn_ref(x, gamma, beta):
    """Pure-JAX reference matching the PyTorch forward exactly."""
    gx = jnp.sqrt(jnp.sum(jnp.square(x), axis=(2, 3), keepdims=True))
    nx = gx / (jnp.mean(gx, axis=1, keepdims=True) + 1e-6)
    return gamma * (x * nx) + beta + x


# ---------------------------------------------------------------------------
# Self-test
# ---------------------------------------------------------------------------
if __name__ == "__main__":
    keys = jax.random.split(jax.random.PRNGKey(0), 12)

    def run_case(i, shape, **kw):
        N, C, H, W = shape
        kx, kg, kb = keys[3 * i], keys[3 * i + 1], keys[3 * i + 2]
        x = jax.random.normal(kx, shape, dtype=jnp.float32)
        # Module __init__ uses zeros for gamma/beta; use nonzero values so the
        # normalization path is actually exercised.
        gamma = jax.random.normal(kg, (1, C, 1, 1), dtype=jnp.float32)
        beta = jax.random.normal(kb, (1, C, 1, 1), dtype=jnp.float32)
        out = jax.block_until_ready(grn_pallas(x, gamma, beta, **kw))
        ref = grn_ref(x, gamma, beta)
        assert out.shape == ref.shape
        assert jnp.allclose(out, ref, atol=1e-5, rtol=1e-5), f"mismatch (case {i})"

    # 1) canonical small shape: fused path, nb=1, grid=(2,).
    run_case(0, (2, 4, 16, 16))
    # 2) fused path, one sample per step, grid=(4,).
    run_case(1, (4, 8, 8, 8))
    # 3) N not divisible by the batch block (nb=2, grid=5): boundary block.
    run_case(2, (9, 4, 8, 8))
    # 4) HW-split two-pass path with a masked partial last HW tile (forced via a
    #    small block cap so the test stays tiny).
    run_case(3, (1, 8, 32, 63), block_cap_bytes=32 << 10)

    print("KERNEL_OK")
</pallas_src>

<mosaic_0001>
module attributes {stable_mosaic.version = 11 : i64} {
  func.func @_grn_fused_kernel(%arg0: i32, %arg1: memref<1x4x256xf32, #tpu.memory_space<vmem>>, %arg2: memref<1x4x1xf32, #tpu.memory_space<vmem>>, %arg3: memref<1x4x1xf32, #tpu.memory_space<vmem>>, %arg4: memref<1x4x256xf32, #tpu.memory_space<vmem>>) attributes {dimension_semantics = [#tpu.dimension_semantics<parallel>], iteration_bounds = array<i64: 2>, scalar_prefetch = 0 : i64, scratch_operands = 0 : i64, tpu.core_type = #tpu.core_type<tc>, window_params = [{transform_indices = @transform_0, window_bounds = array<i64: 1, 4, 256>}, {pipeline_mode = #tpu.pipeline_mode<synchronous>, transform_indices = @transform_1, window_bounds = array<i64: 1, 4, 1>}, {pipeline_mode = #tpu.pipeline_mode<synchronous>, transform_indices = @transform_2, window_bounds = array<i64: 1, 4, 1>}, {transform_indices = @transform_3, window_bounds = array<i64: 1, 4, 256>}]} {
    %c0 = arith.constant 0 : index
    %c0_0 = arith.constant 0 : index
    %c0_1 = arith.constant 0 : index
    %0 = vector.load %arg1[%c0, %c0_0, %c0_1] : memref<1x4x256xf32, #tpu.memory_space<vmem>>, vector<1x4x256xf32>
    %1 = arith.mulf %0, %0 : vector<1x4x256xf32>
    %cst = arith.constant dense<0.000000e+00> : vector<1x4xf32>
    %2 = vector.multi_reduction <add>, %1, %cst [2] : vector<1x4x256xf32> to vector<1x4xf32>
    %3 = vector.shape_cast %2 : vector<1x4xf32> to vector<1x4x1xf32>
    %4 = math.sqrt %3 : vector<1x4x1xf32>
    %cst_2 = arith.constant dense<0.000000e+00> : vector<1x1xf32>
    %5 = vector.multi_reduction <add>, %4, %cst_2 [1] : vector<1x4x1xf32> to vector<1x1xf32>
    %6 = vector.shape_cast %5 : vector<1x1xf32> to vector<1x1x1xf32>
    %cst_3 = arith.constant 4.000000e+00 : f32
    %7 = vector.broadcast %cst_3 : f32 to vector<1x1x1xf32>
    %8 = arith.divf %6, %7 : vector<1x1x1xf32>
    %cst_4 = arith.constant 9.99999997E-7 : f32
    %9 = vector.broadcast %cst_4 : f32 to vector<1x1x1xf32>
    %10 = arith.addf %8, %9 : vector<1x1x1xf32>
    %11 = tpu.reciprocal %10 : vector<1x1x1xf32> -> vector<1x1x1xf32>
    %c0_5 = arith.constant 0 : index
    %c0_6 = arith.constant 0 : index
    %c0_7 = arith.constant 0 : index
    %12 = vector.load %arg2[%c0_5, %c0_6, %c0_7] : memref<1x4x1xf32, #tpu.memory_space<vmem>>, vector<1x4x1xf32>
    %c0_8 = arith.constant 0 : index
    %c0_9 = arith.constant 0 : index
    %c0_10 = arith.constant 0 : index
    %13 = vector.load %arg3[%c0_8, %c0_9, %c0_10] : memref<1x4x1xf32, #tpu.memory_space<vmem>>, vector<1x4x1xf32>
    %14 = vector.broadcast %11 : vector<1x1x1xf32> to vector<1x4x1xf32>
    %15 = arith.mulf %4, %14 : vector<1x4x1xf32>
    %16 = arith.mulf %12, %15 : vector<1x4x1xf32>
    %cst_11 = arith.constant 1.000000e+00 : f32
    %17 = vector.broadcast %cst_11 : f32 to vector<1x4x1xf32>
    %18 = arith.addf %16, %17 : vector<1x4x1xf32>
    %19 = vector.broadcast %18 : vector<1x4x1xf32> to vector<1x4x256xf32>
    %20 = arith.mulf %0, %19 : vector<1x4x256xf32>
    %21 = vector.broadcast %13 : vector<1x4x1xf32> to vector<1x4x256xf32>
    %22 = arith.addf %20, %21 : vector<1x4x256xf32>
    %c0_12 = arith.constant 0 : index
    %c0_13 = arith.constant 0 : index
    %c0_14 = arith.constant 0 : index
    %23 = vector.load %arg4[%c0_12, %c0_13, %c0_14] : memref<1x4x256xf32, #tpu.memory_space<vmem>>, vector<1x4x256xf32>
    tpu.vector_store %arg4[%c0_12, %c0_13, %c0_14], %22 {strides = array<i32>} : memref<1x4x256xf32, #tpu.memory_space<vmem>>, vector<1x4x256xf32>,
    return
  }
  func.func @transform_0(%arg0: i32) -> (i32, i32, i32) {
    %c0_i32 = arith.constant 0 : i32
    %c0_i32_0 = arith.constant 0 : i32
    %c0_i32_1 = arith.constant 0 : i32
    return %arg0, %c0_i32, %c0_i32_0 : i32, i32, i32
  }
  func.func @transform_1(%arg0: i32) -> (i32, i32, i32) {
    %c0_i32 = arith.constant 0 : i32
    %c0_i32_0 = arith.constant 0 : i32
    %c0_i32_1 = arith.constant 0 : i32
    %c0_i32_2 = arith.constant 0 : i32
    return %c0_i32, %c0_i32_0, %c0_i32_1 : i32, i32, i32
  }
  func.func @transform_2(%arg0: i32) -> (i32, i32, i32) {
    %c0_i32 = arith.constant 0 : i32
    %c0_i32_0 = arith.constant 0 : i32
    %c0_i32_1 = arith.constant 0 : i32
    %c0_i32_2 = arith.constant 0 : i32
    return %c0_i32, %c0_i32_0, %c0_i32_1 : i32, i32, i32
  }
  func.func @transform_3(%arg0: i32) -> (i32, i32, i32) {
    %c0_i32 = arith.constant 0 : i32
    %c0_i32_0 = arith.constant 0 : i32
    %c0_i32_1 = arith.constant 0 : i32
    return %arg0, %c0_i32, %c0_i32_0 : i32, i32, i32
  }
}

</mosaic_0001>

<llo_original>
// kernel: tpu_custom_call.1
$region0: #{tpu_custom_call.1}
  #allocation0 [shape = 'u32[]', space=smem, size = 0x4, offset = 0x4, fixed_abs, tag = 'smem constant byte address 0x4 - core index']
  #allocation1 [shape = 'u32[72,128]{1,0:T(1,128)}', space=vmem, size = 0x9000, scoped, tag = 'internal scratch']
  %s0 = inlined_call_operand.hbm [shape: f32[2,4,256], index: 0, kind: input, shape index: {}]
  %s1 = inlined_call_operand.vmem [shape: f32[1,4,1], index: 1, kind: input, shape index: {}]
  %s2 = inlined_call_operand.vmem [shape: f32[1,4,1], index: 2, kind: input, shape index: {}]
  %s3 = inlined_call_operand.hbm [shape: f32[2,4,256], index: 3, kind: output, shape index: {}]
  %s4 = sld [smem:[#allocation0]]
  $region49: #{tpu_custom_call.1} parent=0
    _
  %s6 = ssub.s32 1, %s4
  %s7 = scalar_select 0, %s6, %s4
  $region1: #{tpu_custom_call.1} parent=0
    #allocation2 [shape = 'u8[8192]{0}', space=vmem, size = 0x2000, scoped, tag = 'input window, operand 0']
    #allocation3 [shape = 's32[2]{0}', space=sflag, size = 0x8, scoped, tag = 'scoped memory for tpu_custom_call.1']
    #allocation4 [shape = 's32[2]{0}', space=sflag, size = 0x8, scoped, tag = 'scoped memory for tpu_custom_call.1']
    #allocation5 [shape = 'u8[8192]{0}', space=vmem, size = 0x2000, scoped, tag = 'output window, operand 0']
    %8 = vsyncpa [#allocation3], 0
    %s9 = scalar_lea.sflag [#allocation3], 1
    %10 = vsyncpa %s9, 0
    %11 = vsyncpa [#allocation4], 0
    %s12 = scalar_lea.sflag [#allocation4], 1
    %13 = vsyncpa %s12, 0
    loop: start=0, step=1, limit=4
    $region2: #{tpu_custom_call.1} parent=1 // loop_pre_header
      _
    $region3: #{tpu_custom_call.1} parent=1 // loop_header
      %s15 = sphi 0, %s19
      %p16 = scmp.ge.s32.totalorder %s15, 4
      %s25 = sphi 0, %s27
      %s28 = sphi 0, %s25
      %s29 = sphi 0, %s28
      %s45 = sphi 0, %s29
      %s49 = sphi 0, %s49
      %s51 = sphi 0, %s49
      %s52 = sphi 0, %s51
      %s66 = sphi 0, %s52
      %s70 = sphi 0, %s70
      %s72 = sphi 0, %s70
      %s73 = sphi 0, %s72
      %s87 = sphi 0, %s73
      %s93 = sphi 0, %s95
      %s96 = sphi 0, %s93
      %s97 = sphi 0, %s96
      %s113 = sphi 0, %s97
    $region4: #{tpu_custom_call.1} parent=1 // loop_header_branch
      %18 = sbr.rel (%p16) target = $region8
    $region5: #{tpu_custom_call.1} parent=1 // loop_body
      %s20 = ssub.s32 %s15, 1
      %s21 = ssub.s32 %s15, 2
      %s22 = sadd.s32 %s15, 1
      %s23 = ssub.s32 %s15, %s22
      %p24 = scmp.eq.s32.totalorder %s23, 0
      %s26 = sadd.s32 %s25, 1
      %s27 = scalar_select %p24, %s25, %s26
      %p30 = pneg %p24
      %p31 = scmp.eq.s32.totalorder %s15, 1
      %p32 = por %p30, %p31
      %p33 = scmp.ne.s32.totalorder %s25, %s28
      %p34 = scmp.eq.s32.totalorder %s15, 0
      %p35 = por %p33, %p34
      %p36 = scmp.ne.s32.totalorder %s25, %s28
      %p37 = scmp.eq.s32.totalorder %s20, 1
      %p38 = por %p36, %p37
      %p39 = scmp.ne.s32.totalorder %s28, %s29
      %p40 = scmp.eq.s32.totalorder %s20, 0
      %p41 = por %p39, %p40
      %p42 = scmp.ne.s32.totalorder %s28, %s29
      %p43 = scmp.eq.s32.totalorder %s21, 1
      %p44 = por %p42, %p43
      %p46 = scmp.ne.s32.totalorder %s29, %s45
      %p47 = scmp.eq.s32.totalorder %s21, 0
      %p48 = por %p46, %p47
      %s50 = sadd.s32 %s49, 1
      %p53 = scmp.eq.s32.totalorder %s15, 1
      %p54 = scmp.ne.s32.totalorder %s49, %s51
      %p55 = scmp.eq.s32.totalorder %s15, 0
      %p56 = por %p54, %p55
      %p57 = scmp.ne.s32.totalorder %s49, %s51
      %p58 = scmp.eq.s32.totalorder %s20, 1
      %p59 = por %p57, %p58
      %p60 = scmp.ne.s32.totalorder %s51, %s52
      %p61 = scmp.eq.s32.totalorder %s20, 0
      %p62 = por %p60, %p61
      %p63 = scmp.ne.s32.totalorder %s51, %s52
      %p64 = scmp.eq.s32.totalorder %s21, 1
      %p65 = por %p63, %p64
      %p67 = scmp.ne.s32.totalorder %s52, %s66
      %p68 = scmp.eq.s32.totalorder %s21, 0
      %p69 = por %p67, %p68
      %s71 = sadd.s32 %s70, 1
      %p74 = scmp.eq.s32.totalorder %s15, 1
      %p75 = scmp.ne.s32.totalorder %s70, %s72
      %p76 = scmp.eq.s32.totalorder %s15, 0
      %p77 = por %p75, %p76
      %p78 = scmp.ne.s32.totalorder %s70, %s72
      %p79 = scmp.eq.s32.totalorder %s20, 1
      %p80 = por %p78, %p79
      %p81 = scmp.ne.s32.totalorder %s72, %s73
      %p82 = scmp.eq.s32.totalorder %s20, 0
      %p83 = por %p81, %p82
      %p84 = scmp.ne.s32.totalorder %s72, %s73
      %p85 = scmp.eq.s32.totalorder %s21, 1
      %p86 = por %p84, %p85
      %p88 = scmp.ne.s32.totalorder %s73, %s87
      %p89 = scmp.eq.s32.totalorder %s21, 0
      %p90 = por %p88, %p89
      %s91 = ssub.s32 %s15, %s22
      %p92 = scmp.eq.s32.totalorder %s91, 0
      %s94 = sadd.s32 %s93, 1
      %s95 = scalar_select %p92, %s93, %s94
      %p98 = pneg %p92
      %p99 = scmp.eq.s32.totalorder %s15, 1
      %p100 = por %p98, %p99
      %p101 = scmp.ne.s32.totalorder %s93, %s96
      %p102 = scmp.eq.s32.totalorder %s15, 0
      %p103 = por %p101, %p102
      %p104 = scmp.ne.s32.totalorder %s93, %s96
      %p105 = scmp.eq.s32.totalorder %s20, 1
      %p106 = por %p104, %p105
      %p107 = scmp.ne.s32.totalorder %s96, %s97
      %p108 = scmp.eq.s32.totalorder %s20, 0
      %p109 = por %p107, %p108
      %p110 = scmp.ne.s32.totalorder %s96, %s97
      %p111 = scmp.eq.s32.totalorder %s21, 1
      %p112 = por %p110, %p111
      %p114 = scmp.ne.s32.totalorder %s97, %s113
      %p115 = scmp.eq.s32.totalorder %s21, 0
      %p116 = por %p114, %p115
      %p117 = scmp.le.s32.totalorder 1, %s15
      %p118 = scmp.lt.s32.totalorder %s15, 3
      %p119 = pnand %p117, %p118
      %p120 = pneg %p119
      // Predicated region
      $region9: #{tpu_custom_call.1} parent=5 // pred_check
        _
      $region10: #{tpu_custom_call.1} parent=5 // pred_check_branch
        %122 = sbr.rel (%p119) target = $region12
      $region11: #{tpu_custom_call.1} parent=5 // pred_region
        %s123 = ssub.s32 %s15, 1
        // Predicated region
        $region13: #{tpu_custom_call.1} parent=11 // pred_check
          %p124 = pneg %p62
        $region14: #{tpu_custom_call.1} parent=11 // pred_check_branch
          %126 = sbr.rel (%p124) target = $region16
        $region15: #{tpu_custom_call.1} parent=11 // pred_region
          _
        $region16: #{tpu_custom_call.1} parent=11 // pred_fallthru
          _
        // Predicated region
        $region17: #{tpu_custom_call.1} parent=11 // pred_check
          %p127 = pneg %p83
        $region18: #{tpu_custom_call.1} parent=11 // pred_check_branch
          %129 = sbr.rel (%p127) target = $region20
        $region19: #{tpu_custom_call.1} parent=11 // pred_region
          _
        $region20: #{tpu_custom_call.1} parent=11 // pred_fallthru
          _
      $region12: #{tpu_custom_call.1} parent=5 // pred_fallthru
        _
      %p130 = scmp.lt.s32.totalorder %s15, 2
      // Predicated region
      $region21: #{tpu_custom_call.1} parent=5 // pred_check
        %p131 = pneg %p130
      $region22: #{tpu_custom_call.1} parent=5 // pred_check_branch
        %133 = sbr.rel (%p131) target = $region24
      $region23: #{tpu_custom_call.1} parent=5 // pred_region
        // Predicated region
        $region25: #{tpu_custom_call.1} parent=23 // pred_check
          %p134 = pneg %p35
        $region26: #{tpu_custom_call.1} parent=23 // pred_check_branch
          %136 = sbr.rel (%p134) target = $region28
        $region27: #{tpu_custom_call.1} parent=23 // pred_region
          %s137 = sand.u32 %s25, 1
          %s138 = scalar_lea.sflag [#allocation3], %s137
          %s139 = sand.u32 %s25, 1
          %s140 = smul.addr %s139, 8
          %s141 = scalar_lea.vmem [#allocation2], %s140
          %143 = vsyncadd %s138, 0
          %s144 = smul.addr %s15, 2
          %s145 = smul.addr %s144, 4
          %s146 = scalar_lea.hbm %s0, %s145
          %s148 = sshll.u32 %s146, 4
          %s149 = int_to_ptr.hbm [resolvable:$true] %s148
          %s150 = sshll.u32 %s141, 4
          %s151 = int_to_ptr.vmem [resolvable:$true] %s150
          %153 = dma.hbm_to_vmem [thread:$0]  %s149, 128, %s151, %s138
        $region28: #{tpu_custom_call.1} parent=23 // pred_fallthru
          _
      $region24: #{tpu_custom_call.1} parent=5 // pred_fallthru
        _
      %p154 = scmp.le.s32.totalorder 1, %s15
      %p155 = scmp.lt.s32.totalorder %s15, 3
      %p156 = pnand %p154, %p155
      %p157 = pneg %p156
      // Predicated region
      $region29: #{tpu_custom_call.1} parent=5 // pred_check
        _
      $region30: #{tpu_custom_call.1} parent=5 // pred_check_branch
        %159 = sbr.rel (%p156) target = $region32
      $region31: #{tpu_custom_call.1} parent=5 // pred_region
        %s160 = ssub.s32 %s15, 1
        %s161 = sand.u32 %s28, 1
        %s162 = scalar_lea.sflag [#allocation3], %s161
        %s163 = sand.u32 %s28, 1
        %s164 = smul.addr %s163, 8
        %s165 = scalar_lea.vmem [#allocation2], %s164
        // Predicated region
        $region33: #{tpu_custom_call.1} parent=31 // pred_check
          %p166 = pneg %p41
        $region34: #{tpu_custom_call.1} parent=31 // pred_check_branch
          %168 = sbr.rel (%p166) target = $region36
        $region35: #{tpu_custom_call.1} parent=31 // pred_region
          %170 = dma.done %s162, 128
        $region36: #{tpu_custom_call.1} parent=31 // pred_fallthru
          _
        %s171 = sand.u32 %s28, 1
        %s172 = scalar_lea.sflag [#allocation3], %s171
        %s173 = sand.u32 %s28, 1
        %s174 = smul.addr %s173, 8
        %s175 = scalar_lea.vmem [#allocation2], %s174
        %p176 = pneg %p41
        %p177 = pneg %p38
        %p178 = pneg %p62
        %p179 = pneg %p59
        %p180 = pneg %p83
        %p181 = pneg %p80
        %p182 = pneg %p109
        %p183 = pneg %p106
        %s184 = sand.u32 %s96, 1
        %s185 = scalar_lea.sflag [#allocation4], %s184
        %s186 = sand.u32 %s96, 1
        %s187 = smul.addr %s186, 8
        %s188 = scalar_lea.vmem [#allocation5], %s187
        %v189 = vld [vmem:[%s165] sm:$0xff]
        %v190 = vmul.f32 %v189, %v189
        %192 = vst [vmem:[#allocation1] ss:$2 sm:$0xff] %v190
        %v193 = vld.sshfl [vmem:[#allocation1] sm:$0xff pattern:$0x75316420]
        %v194 = vld.sshfl [vmem:[#allocation1 + $0x8] sm:$0xff pattern:$0x75316420]
        %vm197 = vcmask 1043456
        %v198 = vsel %vm197, %v193, 0.0
        %v199 = vsel %vm197, %v194, 0.0
        %v200 = vadd.f32 %v198, %v199
        %201 = vadd.xlane.f32.xlu0 %v200
        %v202 = vpop.xlane.xlu0 %201
        %v203 = vrsqrt.pop %v202
        %v204 = vmul.f32 %v203, %v202
        %v205 = vmul.f32 %v204, %v203
        %v206 = vmul.f32 0.5, %v205
        %v207 = vsub.f32 1.5, %v206
        %v208 = vmul.f32 %v203, %v207
        %v209 = vmul.f32 %v202, %v208
        %vm210 = vcmp.eq.f32.partialorder %v202, inf
        %v211 = vsel %vm210, %v202, %v209
        %vm212 = vcmp.eq.f32.partialorder %v202, 0.0
        %v213 = vand.u32 %v202, 2147483648
        %v214 = vsel %vm212, %v213, %v211
        %v215 = vsel %vm197, %v214, 0.0
        %v216 = vrot.slane %v215, 4
        %v217 = vadd.f32 %v215, %v216
        %v218 = vrot.slane %v217, 2
        %v219 = vadd.f32 %v217, %v218
        %v220 = vrot.slane %v219, 1
        %v221 = vadd.f32 %v219, %v220
        %v222 = vrcp.pop 4.0
        %v223 = vmul.f32 4.0, %v222
        %v224 = vsub.f32 1.0, %v223
        %v225 = vmul.f32 %v222, %v224
        %v226 = vadd.f32 %v222, %v225
        %vm227 = vweird.f32 %v222
        %v228 = vsel %vm227, %v222, %v226
        %v229 = vmul.f32 %v221, %v228
        %v230 = vadd.f32 %v229, 1e-06
        %v231 = vrcp.pop %v230
        %v232 = vmul.f32 %v230, %v231
        %v233 = vsub.f32 1.0, %v232
        %v234 = vmul.f32 %v231, %v233
        %v235 = vadd.f32 %v231, %v234
        %vm236 = vweird.f32 %v230
        %vm237 = vweird.f32 %v231
        %vm238 = vmor %vm236, %vm237
        %v239 = vsel %vm238, %v231, %v235
        %v240 = vand.u32 2147483647, %v230
        %vm241 = vcmp.eq.f32.partialorder %v240, 8.507059e+37
        %v242 = vand.u32 %v230, 2147483648
        %v243 = vor.u32 1.1754944e-38, %v242
        %v244 = vsel %vm241, %v243, %v239
        %v245 = vld [vmem:[%s1] sm:$0xf]
        %v246 = vld [vmem:[%s2] sm:$0xf]
        %v247 = vmul.f32 %v214, %v244
        %v248 = vmul.f32 %v245, %v247
        %v249 = vadd.f32 %v248, 1.0
        %251 = vset.pattern.permute.xlu0 0
        %252 = vperm.xlu0 %251, %v249
        %v253 = vpop.permute.xlu0 %252
        %v255 = vunpack.c.l.s4 839922192
        %v256 = vunpack.c.0.s8 %v255
        %v257 = vperm.slane %v253, %v256
        %v259 = vmul.f32 %v189, %v257
        %261 = vset.pattern.permute.xlu0 0
        %262 = vperm.xlu0 %261, %v246
        %v263 = vpop.permute.xlu0 %262
        %v265 = vunpack.c.l.s4 839922192
        %v266 = vunpack.c.0.s8 %v265
        %v267 = vperm.slane %v263, %v266
        %v269 = vadd.f32 %v259, %v267
        %270 = vst [vmem:[%s188] sm:$0xff] %v269
        %s271 = sand.u32 %s96, 1
        %s272 = scalar_lea.sflag [#allocation4], %s271
        %s273 = sand.u32 %s96, 1
        %s274 = smul.addr %s273, 8
        %s275 = scalar_lea.vmem [#allocation5], %s274
        // Predicated region
        $region37: #{tpu_custom_call.1} parent=31 // pred_check
          %p276 = pneg %p106
        $region38: #{tpu_custom_call.1} parent=31 // pred_check_branch
          %278 = sbr.rel (%p276) target = $region40
        $region39: #{tpu_custom_call.1} parent=31 // pred_region
          %280 = vsyncadd %s272, 0
          %s281 = smul.addr %s20, 2
          %s282 = smul.addr %s281, 4
          %s283 = scalar_lea.hbm %s3, %s282
          %s285 = sshll.u32 %s275, 4
          %s286 = int_to_ptr.vmem [resolvable:$true] %s285
          %s287 = sshll.u32 %s283, 4
          %s288 = int_to_ptr.hbm [resolvable:$true] %s287
          %290 = dma.vmem_to_hbm [thread:$0]  %s286, 128, %s288, %s272
        $region40: #{tpu_custom_call.1} parent=31 // pred_fallthru
          _
      $region32: #{tpu_custom_call.1} parent=5 // pred_fallthru
        _
      %p291 = scmp.le.s32.totalorder 2, %s15
      // Predicated region
      $region41: #{tpu_custom_call.1} parent=5 // pred_check
        %p292 = pneg %p291
      $region42: #{tpu_custom_call.1} parent=5 // pred_check_branch
        %294 = sbr.rel (%p292) target = $region44
      $region43: #{tpu_custom_call.1} parent=5 // pred_region
        %s295 = ssub.s32 %s15, 2
        // Predicated region
        $region45: #{tpu_custom_call.1} parent=43 // pred_check
          %p296 = pneg %p112
        $region46: #{tpu_custom_call.1} parent=43 // pred_check_branch
          %298 = sbr.rel (%p296) target = $region48
        $region47: #{tpu_custom_call.1} parent=43 // pred_region
          %s299 = sand.u32 %s97, 1
          %s300 = scalar_lea.sflag [#allocation4], %s299
          %s301 = sand.u32 %s97, 1
          %s302 = smul.addr %s301, 8
          %s303 = scalar_lea.vmem [#allocation5], %s302
          %305 = dma.done %s300, 128
        $region48: #{tpu_custom_call.1} parent=43 // pred_fallthru
          _
      $region44: #{tpu_custom_call.1} parent=5 // pred_fallthru
        _
    $region6: #{tpu_custom_call.1} parent=1 // loop_footer
      %s19 = sadd.s32 1, %s15
    $region7: #{tpu_custom_call.1} parent=1 // loop_footer_branch
      %14 = sbr.rel target = $region3
    $region8: #{tpu_custom_call.1} parent=1 // loop_exit
      _
    %306 = vsyncpa [#allocation3], 1
    %s307 = scalar_lea.sflag [#allocation3], 1
    %308 = vsyncpa %s307, 1
    %309 = vsyncpa [#allocation4], 1
    %s310 = scalar_lea.sflag [#allocation4], 1
    %311 = vsyncpa %s310, 1

</llo_original>
